<compile_context>
chip_gen: v7x
topology: tpu7x:2x2x1
jax: 0.10.0
libtpu: 0.0.40
codegen_flags: <defaults>
</compile_context>

<pallas_src>
import jax
import jax.numpy as jnp
from jax import lax
from jax.experimental import pallas as pl
from jax.experimental.pallas import tpu as pltpu


def mlp_kernel(x_ref, w1_ref, b1_ref, w2_ref, b2_ref, o_ref):
    # h_t[h, b] = sum_d W1[h, d] * x[b, d]   -> (H, TILE_B)
    # dot_general contracts the last dim of both operands (q @ k^T pattern), so x is
    # consumed in its natural (TILE_B, D) layout, no transpose needed.
    x = x_ref[...].astype(jnp.float32)          # in-kernel cast (x may be bf16/f16)
    h_t = lax.dot_general(
        w1_ref[...], x,
        dimension_numbers=(((1,), (1,)), ((), ())),
        precision=lax.Precision.HIGHEST,         # full-f32 MXU passes; mem-bound so free
        preferred_element_type=jnp.float32,
    )
    z = h_t + b1_ref[...]                        # (H, TB) + (H, 1) lane-broadcast
    h = 0.5 * (jnp.tanh(0.5 * z) + 1.0)          # sigmoid via a single EUP tanh op

    # Second layer: VPU multiply by the W2 column + XLU sublane reduce -> (1, TILE_B).
    y = jnp.sum(h * w2_ref[...], axis=0, keepdims=True)
    o_ref[...] = y + b2_ref[0]                   # b2 scalar from SMEM; lane-dense store
    # TODO(synk): if a v7x bundle dump shows h_t round-tripping VMEM (vst/vld between
    # the MXU pop and the reduce), strip-mine the post-matmul elementwise+reduce with
    # lax.fori_loop(..., unroll=True) over <=512-lane strips kept in vregs.


def _round_up(v, m):
    return (v + m - 1) // m * m


def _num_tensorcores():
    # Only v7x has 2 TensorCores per chip; everything else here is 1.
    try:
        kind = jax.devices()[0].device_kind.lower()
        if "v7" in kind:
            return 2
    except Exception:
        pass
    return 1


_MAX_TILE_B = 32768        # 4 MiB of f32 x at D=32; well inside scoped VMEM
_MIN_SPLIT_TILE_B = 4096   # never split a step below ~512 KiB of x


def _choose_tile_b(n, num_tc):
    n_al = _round_up(n, 128)
    tile_b = min(n_al, _MAX_TILE_B)
    if num_tc >= 2:
        # Aim for >= 2 grid steps per TensorCore (megacore sharding), but keep each
        # step big enough to stay out of the per-step-overhead regime.
        per_step = _round_up(pl.cdiv(n_al, 2 * num_tc), 128)
        if per_step >= _MIN_SPLIT_TILE_B:
            tile_b = min(tile_b, per_step)
    return max(128, tile_b)


def neural_function_forward(x, w1, b1, w2, b2, *, tile_b=None):
    """Forward of the PyTorch module: sigmoid(x @ W1^T + b1) @ W2^T + b2.

    x : (N, D) any float dtype (cast to f32 *inside* the kernel, matching input.float())
    w1: (H, D)   b1: (H,)    -- nn.Linear(D, H) native layout
    w2: (1, H)   b2: (1,)    -- nn.Linear(H, 1) native layout
    Returns (N, 1) float32.
    """
    x = jnp.asarray(x)
    N, D = x.shape
    H, D2 = w1.shape
    assert D == D2, "w1 must be (hidden, dimension)"

    if tile_b is None:
        tile_b = _choose_tile_b(N, _num_tensorcores())
    else:
        tile_b = max(128, _round_up(int(tile_b), 128))
    grid_n = pl.cdiv(N, tile_b)

    w1_f = jnp.asarray(w1, jnp.float32)                 # (H, D), resident
    b1_col = jnp.asarray(b1, jnp.float32).reshape(H, 1)
    w2_col = jnp.asarray(w2, jnp.float32).reshape(H, 1)
    b2_s = jnp.asarray(b2, jnp.float32).reshape(1)      # scalar, lives in SMEM

    itemsize = jnp.dtype(x.dtype).itemsize
    # VMEM estimate: x double-buffered + in-kernel f32 copy + (H, TILE_B) intermediate
    # + double-buffered output row + weights.
    vmem_est = (2 * tile_b * D * itemsize + tile_b * D * 4 + H * tile_b * 4
                + 2 * tile_b * 4 + (H * D + 3 * H) * 4)
    vmem_limit = None
    if vmem_est > 24 * 1024 * 1024:
        vmem_limit = min(vmem_est * 3 // 2, 64 * 1024 * 1024)

    cost = pl.CostEstimate(
        flops=2 * N * D * H + 4 * N * H,
        transcendentals=N * H,
        bytes_accessed=N * D * itemsize + N * 4 + (H * D + 3 * H + 1) * 4,
    )

    out_row = pl.pallas_call(
        mlp_kernel,
        out_shape=jax.ShapeDtypeStruct((1, N), jnp.float32),
        grid_spec=pltpu.PrefetchScalarGridSpec(
            num_scalar_prefetch=0,
            grid=(grid_n,),
            in_specs=[
                pl.BlockSpec((tile_b, D), lambda i: (i, 0)),        # x tile (streamed)
                pl.BlockSpec((H, D), lambda i: (0, 0)),             # W1 (resident)
                pl.BlockSpec((H, 1), lambda i: (0, 0)),             # b1 column
                pl.BlockSpec((H, 1), lambda i: (0, 0)),             # W2 column
                pl.BlockSpec(memory_space=pltpu.MemorySpace.SMEM),  # b2 scalar
            ],
            out_specs=pl.BlockSpec((1, tile_b), lambda i: (0, i)),  # lane-dense row
        ),
        compiler_params=pltpu.CompilerParams(
            dimension_semantics=("parallel",),
            vmem_limit_bytes=vmem_limit,
        ),
        cost_estimate=cost,
    )(x, w1_f, b1_col, w2_col, b2_s)

    # (1, N) -> (N, 1): layout glue to match the PyTorch module's output shape.
    return out_row.reshape(N, 1)


def _reference(x, w1, b1, w2, b2):
    return jax.nn.sigmoid(x.astype(jnp.float32) @ w1.T + b1) @ w2.T + b2


if __name__ == "__main__":
    # Small shapes consistent with the module: dimension=32, hidden_layer=32.
    dimension = 32
    hidden_layer = 32

    key = jax.random.PRNGKey(0)
    k_x, k_w1, k_b1, k_w2, k_b2, k_x2 = jax.random.split(key, 6)

    # PyTorch-Linear-style uniform init bounds (deterministic).
    bound1 = 1.0 / jnp.sqrt(dimension)
    w1 = jax.random.uniform(k_w1, (hidden_layer, dimension), jnp.float32, -bound1, bound1)
    b1 = jax.random.uniform(k_b1, (hidden_layer,), jnp.float32, -bound1, bound1)
    bound2 = 1.0 / jnp.sqrt(hidden_layer)
    w2 = jax.random.uniform(k_w2, (1, hidden_layer), jnp.float32, -bound2, bound2)
    b2 = jax.random.uniform(k_b2, (1,), jnp.float32, -bound2, bound2)

    # Case 1: tiny batch (16) -- single ragged tile, no HBM padding copy.
    x = jax.random.normal(k_x, (16, dimension), jnp.float32)
    out = jax.block_until_ready(neural_function_forward(x, w1, b1, w2, b2))
    ref = _reference(x, w1, b1, w2, b2)
    assert out.shape == (16, 1)
    assert jnp.allclose(out, ref, atol=1e-5, rtol=1e-5)

    # Case 2: ragged batch (300) -- exercises the partial trailing block path.
    x2 = jax.random.normal(k_x2, (300, dimension), jnp.float32)
    out2 = jax.block_until_ready(neural_function_forward(x2, w1, b1, w2, b2))
    ref2 = _reference(x2, w1, b1, w2, b2)
    assert out2.shape == (300, 1)
    assert jnp.allclose(out2, ref2, atol=1e-5, rtol=1e-5)

    print("KERNEL_OK")
</pallas_src>

<mosaic_0001>
module attributes {stable_mosaic.version = 11 : i64} {
  func.func @mlp_kernel(%arg0: i32, %arg1: memref<128x32xf32, #tpu.memory_space<vmem>>, %arg2: memref<32x32xf32, #tpu.memory_space<vmem>>, %arg3: memref<32x1xf32, #tpu.memory_space<vmem>>, %arg4: memref<32x1xf32, #tpu.memory_space<vmem>>, %arg5: memref<1xf32, #tpu.memory_space<smem>>, %arg6: memref<1x128xf32, #tpu.memory_space<vmem>>) attributes {dimension_semantics = [#tpu.dimension_semantics<parallel>], iteration_bounds = array<i64: 1>, scalar_prefetch = 0 : i64, scratch_operands = 0 : i64, tpu.core_type = #tpu.core_type<tc>, window_params = [{transform_indices = @transform_0, window_bounds = array<i64: 128, 32>}, {pipeline_mode = #tpu.pipeline_mode<synchronous>, transform_indices = @transform_1, window_bounds = array<i64: 32, 32>}, {pipeline_mode = #tpu.pipeline_mode<synchronous>, transform_indices = @transform_2, window_bounds = array<i64: 32, 1>}, {pipeline_mode = #tpu.pipeline_mode<synchronous>, transform_indices = @transform_3, window_bounds = array<i64: 32, 1>}, {transform_indices = @transform_4, window_bounds = array<i64: 1>}, {transform_indices = @transform_5, window_bounds = array<i64: 1, 128>}]} {
    %c0 = arith.constant 0 : index
    %c0_0 = arith.constant 0 : index
    %0 = vector.load %arg1[%c0, %c0_0] : memref<128x32xf32, #tpu.memory_space<vmem>>, vector<128x32xf32>
    %c0_1 = arith.constant 0 : index
    %c0_2 = arith.constant 0 : index
    %1 = vector.load %arg2[%c0_1, %c0_2] : memref<32x32xf32, #tpu.memory_space<vmem>>, vector<32x32xf32>
    %cst = arith.constant dense<0.000000e+00> : vector<32x128xf32>
    %2 = tpu.matmul %1, %0, %cst {dimension_numbers = #tpu.dot_dimension_numbers<[1], [1], [0], [0], [0, 0, 1, 0], [], []>, precision = #tpu.contract_precision<fp32>} : vector<32x32xf32>, vector<128x32xf32>, vector<32x128xf32> -> vector<32x128xf32>
    %c0_3 = arith.constant 0 : index
    %c0_4 = arith.constant 0 : index
    %3 = vector.load %arg3[%c0_3, %c0_4] : memref<32x1xf32, #tpu.memory_space<vmem>>, vector<32x1xf32>
    %4 = vector.broadcast %3 : vector<32x1xf32> to vector<32x128xf32>
    %5 = arith.addf %2, %4 : vector<32x128xf32>
    %cst_5 = arith.constant 5.000000e-01 : f32
    %6 = vector.broadcast %cst_5 : f32 to vector<32x128xf32>
    %7 = arith.mulf %6, %5 : vector<32x128xf32>
    %8 = math.tanh %7 : vector<32x128xf32>
    %cst_6 = arith.constant 1.000000e+00 : f32
    %9 = vector.broadcast %cst_6 : f32 to vector<32x128xf32>
    %10 = arith.addf %8, %9 : vector<32x128xf32>
    %cst_7 = arith.constant 5.000000e-01 : f32
    %11 = vector.broadcast %cst_7 : f32 to vector<32x128xf32>
    %12 = arith.mulf %11, %10 : vector<32x128xf32>
    %c0_8 = arith.constant 0 : index
    %c0_9 = arith.constant 0 : index
    %13 = vector.load %arg4[%c0_8, %c0_9] : memref<32x1xf32, #tpu.memory_space<vmem>>, vector<32x1xf32>
    %14 = vector.broadcast %13 : vector<32x1xf32> to vector<32x128xf32>
    %15 = arith.mulf %12, %14 : vector<32x128xf32>
    %cst_10 = arith.constant dense<0.000000e+00> : vector<128xf32>
    %16 = vector.multi_reduction <add>, %15, %cst_10 [0] : vector<32x128xf32> to vector<128xf32>
    %17 = vector.shape_cast %16 : vector<128xf32> to vector<1x128xf32>
    %c0_11 = arith.constant 0 : index
    %18 = memref.load %arg5[%c0_11] : memref<1xf32, #tpu.memory_space<smem>>
    %19 = vector.broadcast %18 : f32 to vector<1x128xf32>
    %20 = arith.addf %17, %19 : vector<1x128xf32>
    %c0_12 = arith.constant 0 : index
    %c0_13 = arith.constant 0 : index
    %21 = vector.load %arg6[%c0_12, %c0_13] : memref<1x128xf32, #tpu.memory_space<vmem>>, vector<1x128xf32>
    tpu.vector_store %arg6[%c0_12, %c0_13], %20 {strides = array<i32>} : memref<1x128xf32, #tpu.memory_space<vmem>>, vector<1x128xf32>,
    return
  }
  func.func @transform_0(%arg0: i32) -> (i32, i32) {
    %c0_i32 = arith.constant 0 : i32
    %c0_i32_0 = arith.constant 0 : i32
    return %arg0, %c0_i32 : i32, i32
  }
  func.func @transform_1(%arg0: i32) -> (i32, i32) {
    %c0_i32 = arith.constant 0 : i32
    %c0_i32_0 = arith.constant 0 : i32
    %c0_i32_1 = arith.constant 0 : i32
    return %c0_i32, %c0_i32_0 : i32, i32
  }
  func.func @transform_2(%arg0: i32) -> (i32, i32) {
    %c0_i32 = arith.constant 0 : i32
    %c0_i32_0 = arith.constant 0 : i32
    %c0_i32_1 = arith.constant 0 : i32
    return %c0_i32, %c0_i32_0 : i32, i32
  }
  func.func @transform_3(%arg0: i32) -> (i32, i32) {
    %c0_i32 = arith.constant 0 : i32
    %c0_i32_0 = arith.constant 0 : i32
    %c0_i32_1 = arith.constant 0 : i32
    return %c0_i32, %c0_i32_0 : i32, i32
  }
  func.func @transform_4(%arg0: i32) -> i32 {
    %c0_i32 = arith.constant 0 : i32
    %c0_i32_0 = arith.constant 0 : i32
    return %c0_i32 : i32
  }
  func.func @transform_5(%arg0: i32) -> (i32, i32) {
    %c0_i32 = arith.constant 0 : i32
    %c0_i32_0 = arith.constant 0 : i32
    return %c0_i32, %arg0 : i32, i32
  }
}

</mosaic_0001>

<llo_original>
// kernel: tpu_custom_call.1
$region0: #{tpu_custom_call.1}
  #allocation0 [shape = 'u32[]', space=smem, size = 0x4, offset = 0x4, fixed_abs, tag = 'smem constant byte address 0x4 - core index']
  #allocation1 [shape = 'u32[144,128]{1,0:T(1,128)}', space=vmem, size = 0x12000, scoped, tag = 'internal scratch']
  #allocation2 [shape = 'f32[1]{0:T(128)S(6)}', space=smem, size = 0x200, scoped, tag = 'scoped memory for tpu_custom_call.1']
  %s0 = inlined_call_operand.vmem [shape: f32[16,32], index: 0, kind: input, shape index: {}]
  %s1 = inlined_call_operand.vmem [shape: f32[32,32], index: 1, kind: input, shape index: {}]
  %s2 = inlined_call_operand.vmem [shape: f32[32,1], index: 2, kind: input, shape index: {}]
  %s3 = inlined_call_operand.vmem [shape: f32[32,1], index: 3, kind: input, shape index: {}]
  %s4 = inlined_call_operand.<no memory space> [shape: f32[1], index: 4, kind: input, shape index: {}]
  %s5 = inlined_call_operand.hbm [shape: f32[1,16], index: 5, kind: output, shape index: {}]
  %s6 = sld [smem:[#allocation0]]
  $region30: #{tpu_custom_call.1} parent=0
    _
  %s8 = ssub.s32 1, %s6
  %s9 = scalar_select 0, %s8, %s6
  %10 = sst [smem:[#allocation2]] %s4
  $region1: #{tpu_custom_call.1} parent=0
    #allocation3 [shape = 'u8[512]{0}', space=vmem, size = 0x400, scoped, tag = 'output window, operand 0, single buffered']
    #allocation4 [shape = 's32[1]{0}', space=sflag, size = 0x4, scoped, tag = 'scoped memory for tpu_custom_call.1']
    %11 = vsyncpa [#allocation4], 0
    // Predicated region
    $region2: #{tpu_custom_call.1} parent=1 // pred_check
      _
    $region3: #{tpu_custom_call.1} parent=1 // pred_check_branch
      %13 = sbr.rel (0) target = $region5
    $region4: #{tpu_custom_call.1} parent=1 // pred_region
      _
    $region5: #{tpu_custom_call.1} parent=1 // pred_fallthru
      _
    // Predicated region
    $region6: #{tpu_custom_call.1} parent=1 // pred_check
      _
    $region7: #{tpu_custom_call.1} parent=1 // pred_check_branch
      %15 = sbr.rel (0) target = $region9
    $region8: #{tpu_custom_call.1} parent=1 // pred_region
      _
    $region9: #{tpu_custom_call.1} parent=1 // pred_fallthru
      _
    // Predicated region
    $region10: #{tpu_custom_call.1} parent=1 // pred_check
      _
    $region11: #{tpu_custom_call.1} parent=1 // pred_check_branch
      %17 = sbr.rel (0) target = $region13
    $region12: #{tpu_custom_call.1} parent=1 // pred_region
      _
    $region13: #{tpu_custom_call.1} parent=1 // pred_fallthru
      _
    // Predicated region
    $region14: #{tpu_custom_call.1} parent=1 // pred_check
      _
    $region15: #{tpu_custom_call.1} parent=1 // pred_check_branch
      %19 = sbr.rel (0) target = $region17
    $region16: #{tpu_custom_call.1} parent=1 // pred_region
      _
    $region17: #{tpu_custom_call.1} parent=1 // pred_fallthru
      _
    // Predicated region
    $region18: #{tpu_custom_call.1} parent=1 // pred_check
      _
    $region19: #{tpu_custom_call.1} parent=1 // pred_check_branch
      %21 = sbr.rel (0) target = $region21
    $region20: #{tpu_custom_call.1} parent=1 // pred_region
      _
    $region21: #{tpu_custom_call.1} parent=1 // pred_fallthru
      _
    %v22 = vld [vmem:[%s0] sm:$0xff]
    %v23 = vld [vmem:[%s0 + $0x8] sm:$0xff]
    %v24 = vld [vmem:[%s0 + $0x10] sm:$0xff]
    %v25 = vld [vmem:[%s0 + $0x18] sm:$0xff]
    %v26 = vld [vmem:[%s0 + $0x20] sm:$0xff]
    %v27 = vld [vmem:[%s0 + $0x28] sm:$0xff]
    %v28 = vld [vmem:[%s0 + $0x30] sm:$0xff]
    %v29 = vld [vmem:[%s0 + $0x38] sm:$0xff]
    %v30 = vld [vmem:[%s0 + $0x40] sm:$0xff]
    %v31 = vld [vmem:[%s0 + $0x48] sm:$0xff]
    %v32 = vld [vmem:[%s0 + $0x50] sm:$0xff]
    %v33 = vld [vmem:[%s0 + $0x58] sm:$0xff]
    %v34 = vld [vmem:[%s0 + $0x60] sm:$0xff]
    %v35 = vld [vmem:[%s0 + $0x68] sm:$0xff]
    %v36 = vld [vmem:[%s0 + $0x70] sm:$0xff]
    %v37 = vld [vmem:[%s0 + $0x78] sm:$0xff]
    %v38 = vld [vmem:[%s1] sm:$0xff]
    %v39 = vld [vmem:[%s1 + $0x8] sm:$0xff]
    %v40 = vld [vmem:[%s1 + $0x10] sm:$0xff]
    %v41 = vld [vmem:[%s1 + $0x18] sm:$0xff]
    %v42 = vld [vmem:[%s2] sm:$0xff]
    %v43 = vld [vmem:[%s2 + $0x8] sm:$0xff]
    %v44 = vld [vmem:[%s2 + $0x10] sm:$0xff]
    %v45 = vld [vmem:[%s2 + $0x18] sm:$0xff]
    %47 = vset.pattern.permute.xlu0 0
    %48 = vperm.xlu0 %47, %v42
    %v49 = vpop.permute.xlu0 %48
    %52 = vset.pattern.permute.xlu0 0
    %53 = vperm.xlu0 %52, %v43
    %v54 = vpop.permute.xlu0 %53
    %57 = vset.pattern.permute.xlu0 0
    %58 = vperm.xlu0 %57, %v44
    %v59 = vpop.permute.xlu0 %58
    %62 = vset.pattern.permute.xlu0 0
    %63 = vperm.xlu0 %62, %v45
    %v64 = vpop.permute.xlu0 %63
    %vm66 = vcmask 261120
    %v68 = vsel %vm66, %v38, 0
    %v71 = vsel %vm66, %v39, 0
    %v74 = vsel %vm66, %v40, 0
    %v77 = vsel %vm66, %v41, 0
    %v80 = vsel %vm66, %v22, 0
    %v83 = vsel %vm66, %v23, 0
    %v86 = vsel %vm66, %v24, 0
    %v89 = vsel %vm66, %v25, 0
    %v92 = vsel %vm66, %v26, 0
    %v95 = vsel %vm66, %v27, 0
    %v98 = vsel %vm66, %v28, 0
    %v101 = vsel %vm66, %v29, 0
    %v104 = vsel %vm66, %v30, 0
    %v107 = vsel %vm66, %v31, 0
    %v110 = vsel %vm66, %v32, 0
    %v113 = vsel %vm66, %v33, 0
    %v116 = vsel %vm66, %v34, 0
    %v119 = vsel %vm66, %v35, 0
    %v122 = vsel %vm66, %v36, 0
    %v125 = vsel %vm66, %v37, 0
    %127 = vmatprep.subr.mxu0 0.0
    %v128 = vand.u32 %v80, 4294901760
    %129 = vmatpush1.xpose.msra.mxu0 %v128
    %130 = vmatprep.subr.mxu0 0.0
    %v131 = vand.u32 %v83, 4294901760
    %132 = vmatpush1.xpose.msra.mxu0 %v131
    %133 = vmatprep.subr.mxu0 0.0
    %v134 = vand.u32 %v86, 4294901760
    %135 = vmatpush1.xpose.msra.mxu0 %v134
    %136 = vmatprep.subr.mxu0 0.0
    %v137 = vand.u32 %v89, 4294901760
    %138 = vmatpush1.xpose.msra.mxu0 %v137
    %139 = vmatprep.subr.mxu0 0.0
    %v140 = vand.u32 %v92, 4294901760
    %141 = vmatpush1.xpose.msra.mxu0 %v140
    %142 = vmatprep.subr.mxu0 0.0
    %v143 = vand.u32 %v95, 4294901760
    %144 = vmatpush1.xpose.msra.mxu0 %v143
    %145 = vmatprep.subr.mxu0 0.0
    %v146 = vand.u32 %v98, 4294901760
    %147 = vmatpush1.xpose.msra.mxu0 %v146
    %148 = vmatprep.subr.mxu0 0.0
    %v149 = vand.u32 %v101, 4294901760
    %150 = vmatpush1.xpose.msra.mxu0 %v149
    %151 = vmatprep.subr.mxu0 0.0
    %v152 = vand.u32 %v104, 4294901760
    %153 = vmatpush1.xpose.msra.mxu0 %v152
    %154 = vmatprep.subr.mxu0 0.0
    %v155 = vand.u32 %v107, 4294901760
    %156 = vmatpush1.xpose.msra.mxu0 %v155
    %157 = vmatprep.subr.mxu0 0.0
    %v158 = vand.u32 %v110, 4294901760
    %159 = vmatpush1.xpose.msra.mxu0 %v158
    %160 = vmatprep.subr.mxu0 0.0
    %v161 = vand.u32 %v113, 4294901760
    %162 = vmatpush1.xpose.msra.mxu0 %v161
    %163 = vmatprep.subr.mxu0 0.0
    %v164 = vand.u32 %v116, 4294901760
    %165 = vmatpush1.xpose.msra.mxu0 %v164
    %166 = vmatprep.subr.mxu0 0.0
    %v167 = vand.u32 %v119, 4294901760
    %168 = vmatpush1.xpose.msra.mxu0 %v167
    %169 = vmatprep.subr.mxu0 0.0
    %v170 = vand.u32 %v122, 4294901760
    %171 = vmatpush1.xpose.msra.mxu0 %v170
    %172 = vmatprep.subr.mxu0 0.0
    %v173 = vand.u32 %v125, 4294901760
    %174 = vmatpush1.xpose.msra.mxu0 %v173
    %175 = vmatprep.subr.mxu0 0.0
    %176 = vmatpush1.xpose.msra.mxu0 0.0
    %177 = vmatprep.subr.mxu0 0.0
    %178 = vmatpush1.xpose.msra.mxu0 0.0
    %179 = vmatprep.subr.mxu0 0.0
    %180 = vmatpush1.xpose.msra.mxu0 0.0
    %181 = vmatprep.subr.mxu0 0.0
    %182 = vmatpush1.xpose.msra.mxu0 0.0
    %183 = vmatprep.subr.mxu0 0.0
    %184 = vmatpush1.xpose.msra.mxu0 0.0
    %185 = vmatprep.subr.mxu0 0.0
    %186 = vmatpush1.xpose.msra.mxu0 0.0
    %187 = vmatprep.subr.mxu0 0.0
    %188 = vmatpush1.xpose.msra.mxu0 0.0
    %189 = vmatprep.subr.mxu0 0.0
    %190 = vmatpush1.xpose.msra.mxu0 0.0
    %191 = vmatprep.subr.mxu0 0.0
    %192 = vmatpush1.xpose.msra.mxu0 0.0
    %193 = vmatprep.subr.mxu0 0.0
    %194 = vmatpush1.xpose.msra.mxu0 0.0
    %195 = vmatprep.subr.mxu0 0.0
    %196 = vmatpush1.xpose.msra.mxu0 0.0
    %197 = vmatprep.subr.mxu0 0.0
    %198 = vmatpush1.xpose.msra.mxu0 0.0
    %199 = vmatprep.subr.mxu0 0.0
    %200 = vmatpush1.xpose.msra.mxu0 0.0
    %201 = vmatprep.subr.mxu0 0.0
    %202 = vmatpush1.xpose.msra.mxu0 0.0
    %203 = vmatprep.subr.mxu0 0.0
    %204 = vmatpush1.xpose.msra.mxu0 0.0
    %205 = vmatprep.subr.mxu0 0.0
    %206 = vmatpush1.xpose.msra.mxu0 0.0
    %207 = vmatprep.mubr.f32.mxu0 0.0
    %v208 = vand.u32 %v68, 4294901760
    %v209 = vsub.f32 %v68, %v208
    %v210 = vand.u32 %v209, 4294901760
    %v211 = vsub.f32 %v209, %v210
    %v212 = vand.u32 %v211, 4294901760
    %213 = vmatmul.mubr.f32.gmra.mrb[0].mxu0 %v212
    %v214 = vpop.f32.mrb[0].mxu0
    %v215 = vadd.f32 %v49, %v214
    %v216 = vpop.f32.mrb[0].mxu0
    %217 = vmatprep.mubr.f32.mxu0 0.0
    %v218 = vand.u32 %v71, 4294901760
    %v219 = vsub.f32 %v71, %v218
    %v220 = vand.u32 %v219, 4294901760
    %v221 = vsub.f32 %v219, %v220
    %v222 = vand.u32 %v221, 4294901760
    %223 = vmatmul.mubr.f32.gmra.mrb[0].mxu0 %v222
    %v224 = vpop.f32.mrb[0].mxu0
    %v225 = vadd.f32 %v54, %v224
    %v226 = vpop.f32.mrb[0].mxu0
    %227 = vmatprep.mubr.f32.mxu0 0.0
    %v228 = vand.u32 %v74, 4294901760
    %v229 = vsub.f32 %v74, %v228
    %v230 = vand.u32 %v229, 4294901760
    %v231 = vsub.f32 %v229, %v230
    %v232 = vand.u32 %v231, 4294901760
    %233 = vmatmul.mubr.f32.gmra.mrb[0].mxu0 %v232
    %v234 = vpop.f32.mrb[0].mxu0
    %v235 = vadd.f32 %v59, %v234
    %v236 = vpop.f32.mrb[0].mxu0
    %237 = vmatprep.mubr.f32.mxu0 0.0
    %v238 = vand.u32 %v77, 4294901760
    %v239 = vsub.f32 %v77, %v238
    %v240 = vand.u32 %v239, 4294901760
    %v241 = vsub.f32 %v239, %v240
    %v242 = vand.u32 %v241, 4294901760
    %243 = vmatmul.mubr.f32.gmra.mrb[0].mxu0 %v242
    %v244 = vpop.f32.mrb[0].mxu0
    %v245 = vadd.f32 %v64, %v244
    %v246 = vpop.f32.mrb[0].mxu0
    %247 = vdwg.mxu0
    %248 = vmatprep.subr.mxu0 0.0
    %v249 = vand.u32 %v80, 4294901760
    %v250 = vsub.f32 %v80, %v249
    %v251 = vand.u32 %v250, 4294901760
    %v252 = vsub.f32 %v250, %v251
    %v253 = vand.u32 %v252, 4294901760
    %254 = vmatpush1.xpose.msra.mxu0 %v253
    %255 = vmatprep.subr.mxu0 0.0
    %v256 = vand.u32 %v83, 4294901760
    %v257 = vsub.f32 %v83, %v256
    %v258 = vand.u32 %v257, 4294901760
    %v259 = vsub.f32 %v257, %v258
    %v260 = vand.u32 %v259, 4294901760
    %261 = vmatpush1.xpose.msra.mxu0 %v260
    %262 = vmatprep.subr.mxu0 0.0
    %v263 = vand.u32 %v86, 4294901760
    %v264 = vsub.f32 %v86, %v263
    %v265 = vand.u32 %v264, 4294901760
    %v266 = vsub.f32 %v264, %v265
    %v267 = vand.u32 %v266, 4294901760
    %268 = vmatpush1.xpose.msra.mxu0 %v267
    %269 = vmatprep.subr.mxu0 0.0
    %v270 = vand.u32 %v89, 4294901760
    %v271 = vsub.f32 %v89, %v270
    %v272 = vand.u32 %v271, 4294901760
    %v273 = vsub.f32 %v271, %v272
    %v274 = vand.u32 %v273, 4294901760
    %275 = vmatpush1.xpose.msra.mxu0 %v274
    %276 = vmatprep.subr.mxu0 0.0
    %v277 = vand.u32 %v92, 4294901760
    %v278 = vsub.f32 %v92, %v277
    %v279 = vand.u32 %v278, 4294901760
    %v280 = vsub.f32 %v278, %v279
    %v281 = vand.u32 %v280, 4294901760
    %282 = vmatpush1.xpose.msra.mxu0 %v281
    %283 = vmatprep.subr.mxu0 0.0
    %v284 = vand.u32 %v95, 4294901760
    %v285 = vsub.f32 %v95, %v284
    %v286 = vand.u32 %v285, 4294901760
    %v287 = vsub.f32 %v285, %v286
    %v288 = vand.u32 %v287, 4294901760
    %289 = vmatpush1.xpose.msra.mxu0 %v288
    %290 = vmatprep.subr.mxu0 0.0
    %v291 = vand.u32 %v98, 4294901760
    %v292 = vsub.f32 %v98, %v291
    %v293 = vand.u32 %v292, 4294901760
    %v294 = vsub.f32 %v292, %v293
    %v295 = vand.u32 %v294, 4294901760
    %296 = vmatpush1.xpose.msra.mxu0 %v295
    %297 = vmatprep.subr.mxu0 0.0
    %v298 = vand.u32 %v101, 4294901760
    %v299 = vsub.f32 %v101, %v298
    %v300 = vand.u32 %v299, 4294901760
    %v301 = vsub.f32 %v299, %v300
    %v302 = vand.u32 %v301, 4294901760
    %303 = vmatpush1.xpose.msra.mxu0 %v302
    %304 = vmatprep.subr.mxu0 0.0
    %v305 = vand.u32 %v104, 4294901760
    %v306 = vsub.f32 %v104, %v305
    %v307 = vand.u32 %v306, 4294901760
    %v308 = vsub.f32 %v306, %v307
    %v309 = vand.u32 %v308, 4294901760
    %310 = vmatpush1.xpose.msra.mxu0 %v309
    %311 = vmatprep.subr.mxu0 0.0
    %v312 = vand.u32 %v107, 4294901760
    %v313 = vsub.f32 %v107, %v312
    %v314 = vand.u32 %v313, 4294901760
    %v315 = vsub.f32 %v313, %v314
    %v316 = vand.u32 %v315, 4294901760
    %317 = vmatpush1.xpose.msra.mxu0 %v316
    %318 = vmatprep.subr.mxu0 0.0
    %v319 = vand.u32 %v110, 4294901760
    %v320 = vsub.f32 %v110, %v319
    %v321 = vand.u32 %v320, 4294901760
    %v322 = vsub.f32 %v320, %v321
    %v323 = vand.u32 %v322, 4294901760
    %324 = vmatpush1.xpose.msra.mxu0 %v323
    %325 = vmatprep.subr.mxu0 0.0
    %v326 = vand.u32 %v113, 4294901760
    %v327 = vsub.f32 %v113, %v326
    %v328 = vand.u32 %v327, 4294901760
    %v329 = vsub.f32 %v327, %v328
    %v330 = vand.u32 %v329, 4294901760
    %331 = vmatpush1.xpose.msra.mxu0 %v330
    %332 = vmatprep.subr.mxu0 0.0
    %v333 = vand.u32 %v116, 4294901760
    %v334 = vsub.f32 %v116, %v333
    %v335 = vand.u32 %v334, 4294901760
    %v336 = vsub.f32 %v334, %v335
    %v337 = vand.u32 %v336, 4294901760
    %338 = vmatpush1.xpose.msra.mxu0 %v337
    %339 = vmatprep.subr.mxu0 0.0
    %v340 = vand.u32 %v119, 4294901760
    %v341 = vsub.f32 %v119, %v340
    %v342 = vand.u32 %v341, 4294901760
    %v343 = vsub.f32 %v341, %v342
    %v344 = vand.u32 %v343, 4294901760
    %345 = vmatpush1.xpose.msra.mxu0 %v344
    %346 = vmatprep.subr.mxu0 0.0
    %v347 = vand.u32 %v122, 4294901760
    %v348 = vsub.f32 %v122, %v347
    %v349 = vand.u32 %v348, 4294901760
    %v350 = vsub.f32 %v348, %v349
    %v351 = vand.u32 %v350, 4294901760
    %352 = vmatpush1.xpose.msra.mxu0 %v351
    %353 = vmatprep.subr.mxu0 0.0
    %v354 = vand.u32 %v125, 4294901760
    %v355 = vsub.f32 %v125, %v354
    %v356 = vand.u32 %v355, 4294901760
    %v357 = vsub.f32 %v355, %v356
    %v358 = vand.u32 %v357, 4294901760
    %359 = vmatpush1.xpose.msra.mxu0 %v358
    %360 = vmatprep.subr.mxu0 0.0
    %361 = vmatpush1.xpose.msra.mxu0 0.0
    %362 = vmatprep.subr.mxu0 0.0
    %363 = vmatpush1.xpose.msra.mxu0 0.0
    %364 = vmatprep.subr.mxu0 0.0
    %365 = vmatpush1.xpose.msra.mxu0 0.0
    %366 = vmatprep.subr.mxu0 0.0
    %367 = vmatpush1.xpose.msra.mxu0 0.0
    %368 = vmatprep.subr.mxu0 0.0
    %369 = vmatpush1.xpose.msra.mxu0 0.0
    %370 = vmatprep.subr.mxu0 0.0
    %371 = vmatpush1.xpose.msra.mxu0 0.0
    %372 = vmatprep.subr.mxu0 0.0
    %373 = vmatpush1.xpose.msra.mxu0 0.0
    %374 = vmatprep.subr.mxu0 0.0
    %375 = vmatpush1.xpose.msra.mxu0 0.0
    %376 = vmatprep.subr.mxu0 0.0
    %377 = vmatpush1.xpose.msra.mxu0 0.0
    %378 = vmatprep.subr.mxu0 0.0
    %379 = vmatpush1.xpose.msra.mxu0 0.0
    %380 = vmatprep.subr.mxu0 0.0
    %381 = vmatpush1.xpose.msra.mxu0 0.0
    %382 = vmatprep.subr.mxu0 0.0
    %383 = vmatpush1.xpose.msra.mxu0 0.0
    %384 = vmatprep.subr.mxu0 0.0
    %385 = vmatpush1.xpose.msra.mxu0 0.0
    %386 = vmatprep.subr.mxu0 0.0
    %387 = vmatpush1.xpose.msra.mxu0 0.0
    %388 = vmatprep.subr.mxu0 0.0
    %389 = vmatpush1.xpose.msra.mxu0 0.0
    %390 = vmatprep.subr.mxu0 0.0
    %391 = vmatpush1.xpose.msra.mxu0 0.0
    %392 = vmatprep.mubr.f32.mxu0 0.0
    %v393 = vand.u32 %v68, 4294901760
    %394 = vmatmul.mubr.f32.gmra.mrb[0].mxu0 %v393
    %v395 = vpop.f32.mrb[0].mxu0
    %v396 = vadd.f32 %v215, %v395
    %v397 = vpop.f32.mrb[0].mxu0
    %398 = vmatprep.mubr.f32.mxu0 0.0
    %v399 = vand.u32 %v71, 4294901760
    %400 = vmatmul.mubr.f32.gmra.mrb[0].mxu0 %v399
    %v401 = vpop.f32.mrb[0].mxu0
    %v402 = vadd.f32 %v225, %v401
    %v403 = vpop.f32.mrb[0].mxu0
    %404 = vmatprep.mubr.f32.mxu0 0.0
    %v405 = vand.u32 %v74, 4294901760
    %406 = vmatmul.mubr.f32.gmra.mrb[0].mxu0 %v405
    %v407 = vpop.f32.mrb[0].mxu0
    %v408 = vadd.f32 %v235, %v407
    %v409 = vpop.f32.mrb[0].mxu0
    %410 = vmatprep.mubr.f32.mxu0 0.0
    %v411 = vand.u32 %v77, 4294901760
    %412 = vmatmul.mubr.f32.gmra.mrb[0].mxu0 %v411
    %v413 = vpop.f32.mrb[0].mxu0
    %v414 = vadd.f32 %v245, %v413
    %v415 = vpop.f32.mrb[0].mxu0
    %416 = vdwg.mxu0
    %417 = vmatprep.subr.mxu0 0.0
    %v418 = vand.u32 %v80, 4294901760
    %v419 = vsub.f32 %v80, %v418
    %420 = vmatpush1.xpose.msra.mxu0 %v419
    %421 = vmatprep.subr.mxu0 0.0
    %v422 = vand.u32 %v83, 4294901760
    %v423 = vsub.f32 %v83, %v422
    %424 = vmatpush1.xpose.msra.mxu0 %v423
    %425 = vmatprep.subr.mxu0 0.0
    %v426 = vand.u32 %v86, 4294901760
    %v427 = vsub.f32 %v86, %v426
    %428 = vmatpush1.xpose.msra.mxu0 %v427
    %429 = vmatprep.subr.mxu0 0.0
    %v430 = vand.u32 %v89, 4294901760
    %v431 = vsub.f32 %v89, %v430
    %432 = vmatpush1.xpose.msra.mxu0 %v431
    %433 = vmatprep.subr.mxu0 0.0
    %v434 = vand.u32 %v92, 4294901760
    %v435 = vsub.f32 %v92, %v434
    %436 = vmatpush1.xpose.msra.mxu0 %v435
    %437 = vmatprep.subr.mxu0 0.0
    %v438 = vand.u32 %v95, 4294901760
    %v439 = vsub.f32 %v95, %v438
    %440 = vmatpush1.xpose.msra.mxu0 %v439
    %441 = vmatprep.subr.mxu0 0.0
    %v442 = vand.u32 %v98, 4294901760
    %v443 = vsub.f32 %v98, %v442
    %444 = vmatpush1.xpose.msra.mxu0 %v443
    %445 = vmatprep.subr.mxu0 0.0
    %v446 = vand.u32 %v101, 4294901760
    %v447 = vsub.f32 %v101, %v446
    %448 = vmatpush1.xpose.msra.mxu0 %v447
    %449 = vmatprep.subr.mxu0 0.0
    %v450 = vand.u32 %v104, 4294901760
    %v451 = vsub.f32 %v104, %v450
    %452 = vmatpush1.xpose.msra.mxu0 %v451
    %453 = vmatprep.subr.mxu0 0.0
    %v454 = vand.u32 %v107, 4294901760
    %v455 = vsub.f32 %v107, %v454
    %456 = vmatpush1.xpose.msra.mxu0 %v455
    %457 = vmatprep.subr.mxu0 0.0
    %v458 = vand.u32 %v110, 4294901760
    %v459 = vsub.f32 %v110, %v458
    %460 = vmatpush1.xpose.msra.mxu0 %v459
    %461 = vmatprep.subr.mxu0 0.0
    %v462 = vand.u32 %v113, 4294901760
    %v463 = vsub.f32 %v113, %v462
    %464 = vmatpush1.xpose.msra.mxu0 %v463
    %465 = vmatprep.subr.mxu0 0.0
    %v466 = vand.u32 %v116, 4294901760
    %v467 = vsub.f32 %v116, %v466
    %468 = vmatpush1.xpose.msra.mxu0 %v467
    %469 = vmatprep.subr.mxu0 0.0
    %v470 = vand.u32 %v119, 4294901760
    %v471 = vsub.f32 %v119, %v470
    %472 = vmatpush1.xpose.msra.mxu0 %v471
    %473 = vmatprep.subr.mxu0 0.0
    %v474 = vand.u32 %v122, 4294901760
    %v475 = vsub.f32 %v122, %v474
    %476 = vmatpush1.xpose.msra.mxu0 %v475
    %477 = vmatprep.subr.mxu0 0.0
    %v478 = vand.u32 %v125, 4294901760
    %v479 = vsub.f32 %v125, %v478
    %480 = vmatpush1.xpose.msra.mxu0 %v479
    %481 = vmatprep.subr.mxu0 0.0
    %482 = vmatpush1.xpose.msra.mxu0 0.0
    %483 = vmatprep.subr.mxu0 0.0
    %484 = vmatpush1.xpose.msra.mxu0 0.0
    %485 = vmatprep.subr.mxu0 0.0
    %486 = vmatpush1.xpose.msra.mxu0 0.0
    %487 = vmatprep.subr.mxu0 0.0
    %488 = vmatpush1.xpose.msra.mxu0 0.0
    %489 = vmatprep.subr.mxu0 0.0
    %490 = vmatpush1.xpose.msra.mxu0 0.0
    %491 = vmatprep.subr.mxu0 0.0
    %492 = vmatpush1.xpose.msra.mxu0 0.0
    %493 = vmatprep.subr.mxu0 0.0
    %494 = vmatpush1.xpose.msra.mxu0 0.0
    %495 = vmatprep.subr.mxu0 0.0
    %496 = vmatpush1.xpose.msra.mxu0 0.0
    %497 = vmatprep.subr.mxu0 0.0
    %498 = vmatpush1.xpose.msra.mxu0 0.0
    %499 = vmatprep.subr.mxu0 0.0
    %500 = vmatpush1.xpose.msra.mxu0 0.0
    %501 = vmatprep.subr.mxu0 0.0
    %502 = vmatpush1.xpose.msra.mxu0 0.0
    %503 = vmatprep.subr.mxu0 0.0
    %504 = vmatpush1.xpose.msra.mxu0 0.0
    %505 = vmatprep.subr.mxu0 0.0
    %506 = vmatpush1.xpose.msra.mxu0 0.0
    %507 = vmatprep.subr.mxu0 0.0
    %508 = vmatpush1.xpose.msra.mxu0 0.0
    %509 = vmatprep.subr.mxu0 0.0
    %510 = vmatpush1.xpose.msra.mxu0 0.0
    %511 = vmatprep.subr.mxu0 0.0
    %512 = vmatpush1.xpose.msra.mxu0 0.0
    %513 = vmatprep.mubr.f32.mxu0 0.0
    %v514 = vand.u32 %v68, 4294901760
    %v515 = vsub.f32 %v68, %v514
    %516 = vmatmul.mubr.f32.gmra.mrb[0].mxu0 %v515
    %v517 = vpop.f32.mrb[0].mxu0
    %v518 = vadd.f32 %v396, %v517
    %v519 = vpop.f32.mrb[0].mxu0
    %520 = vmatprep.mubr.f32.mxu0 0.0
    %v521 = vand.u32 %v71, 4294901760
    %v522 = vsub.f32 %v71, %v521
    %523 = vmatmul.mubr.f32.gmra.mrb[0].mxu0 %v522
    %v524 = vpop.f32.mrb[0].mxu0
    %v525 = vadd.f32 %v402, %v524
    %v526 = vpop.f32.mrb[0].mxu0
    %527 = vmatprep.mubr.f32.mxu0 0.0
    %v528 = vand.u32 %v74, 4294901760
    %v529 = vsub.f32 %v74, %v528
    %530 = vmatmul.mubr.f32.gmra.mrb[0].mxu0 %v529
    %v531 = vpop.f32.mrb[0].mxu0
    %v532 = vadd.f32 %v408, %v531
    %v533 = vpop.f32.mrb[0].mxu0
    %534 = vmatprep.mubr.f32.mxu0 0.0
    %v535 = vand.u32 %v77, 4294901760
    %v536 = vsub.f32 %v77, %v535
    %537 = vmatmul.mubr.f32.gmra.mrb[0].mxu0 %v536
    %v538 = vpop.f32.mrb[0].mxu0
    %v539 = vadd.f32 %v414, %v538
    %v540 = vpop.f32.mrb[0].mxu0
    %541 = vdwg.mxu0
    %542 = vmatprep.subr.mxu0 0.0
    %v543 = vand.u32 %v80, 4294901760
    %544 = vmatpush1.xpose.msra.mxu0 %v543
    %545 = vmatprep.subr.mxu0 0.0
    %v546 = vand.u32 %v83, 4294901760
    %547 = vmatpush1.xpose.msra.mxu0 %v546
    %548 = vmatprep.subr.mxu0 0.0
    %v549 = vand.u32 %v86, 4294901760
    %550 = vmatpush1.xpose.msra.mxu0 %v549
    %551 = vmatprep.subr.mxu0 0.0
    %v552 = vand.u32 %v89, 4294901760
    %553 = vmatpush1.xpose.msra.mxu0 %v552
    %554 = vmatprep.subr.mxu0 0.0
    %v555 = vand.u32 %v92, 4294901760
    %556 = vmatpush1.xpose.msra.mxu0 %v555
    %557 = vmatprep.subr.mxu0 0.0
    %v558 = vand.u32 %v95, 4294901760
    %559 = vmatpush1.xpose.msra.mxu0 %v558
    %560 = vmatprep.subr.mxu0 0.0
    %v561 = vand.u32 %v98, 4294901760
    %562 = vmatpush1.xpose.msra.mxu0 %v561
    %563 = vmatprep.subr.mxu0 0.0
    %v564 = vand.u32 %v101, 4294901760
    %565 = vmatpush1.xpose.msra.mxu0 %v564
    %566 = vmatprep.subr.mxu0 0.0
    %v567 = vand.u32 %v104, 4294901760
    %568 = vmatpush1.xpose.msra.mxu0 %v567
    %569 = vmatprep.subr.mxu0 0.0
    %v570 = vand.u32 %v107, 4294901760
    %571 = vmatpush1.xpose.msra.mxu0 %v570
    %572 = vmatprep.subr.mxu0 0.0
    %v573 = vand.u32 %v110, 4294901760
    %574 = vmatpush1.xpose.msra.mxu0 %v573
    %575 = vmatprep.subr.mxu0 0.0
    %v576 = vand.u32 %v113, 4294901760
    %577 = vmatpush1.xpose.msra.mxu0 %v576
    %578 = vmatprep.subr.mxu0 0.0
    %v579 = vand.u32 %v116, 4294901760
    %580 = vmatpush1.xpose.msra.mxu0 %v579
    %581 = vmatprep.subr.mxu0 0.0
    %v582 = vand.u32 %v119, 4294901760
    %583 = vmatpush1.xpose.msra.mxu0 %v582
    %584 = vmatprep.subr.mxu0 0.0
    %v585 = vand.u32 %v122, 4294901760
    %586 = vmatpush1.xpose.msra.mxu0 %v585
    %587 = vmatprep.subr.mxu0 0.0
    %v588 = vand.u32 %v125, 4294901760
    %589 = vmatpush1.xpose.msra.mxu0 %v588
    %590 = vmatprep.subr.mxu0 0.0
    %591 = vmatpush1.xpose.msra.mxu0 0.0
    %592 = vmatprep.subr.mxu0 0.0
    %593 = vmatpush1.xpose.msra.mxu0 0.0
    %594 = vmatprep.subr.mxu0 0.0
    %595 = vmatpush1.xpose.msra.mxu0 0.0
    %596 = vmatprep.subr.mxu0 0.0
    %597 = vmatpush1.xpose.msra.mxu0 0.0
    %598 = vmatprep.subr.mxu0 0.0
    %599 = vmatpush1.xpose.msra.mxu0 0.0
    %600 = vmatprep.subr.mxu0 0.0
    %601 = vmatpush1.xpose.msra.mxu0 0.0
    %602 = vmatprep.subr.mxu0 0.0
    %603 = vmatpush1.xpose.msra.mxu0 0.0
    %604 = vmatprep.subr.mxu0 0.0
    %605 = vmatpush1.xpose.msra.mxu0 0.0
    %606 = vmatprep.subr.mxu0 0.0
    %607 = vmatpush1.xpose.msra.mxu0 0.0
    %608 = vmatprep.subr.mxu0 0.0
    %609 = vmatpush1.xpose.msra.mxu0 0.0
    %610 = vmatprep.subr.mxu0 0.0
    %611 = vmatpush1.xpose.msra.mxu0 0.0
    %612 = vmatprep.subr.mxu0 0.0
    %613 = vmatpush1.xpose.msra.mxu0 0.0
    %614 = vmatprep.subr.mxu0 0.0
    %615 = vmatpush1.xpose.msra.mxu0 0.0
    %616 = vmatprep.subr.mxu0 0.0
    %617 = vmatpush1.xpose.msra.mxu0 0.0
    %618 = vmatprep.subr.mxu0 0.0
    %619 = vmatpush1.xpose.msra.mxu0 0.0
    %620 = vmatprep.subr.mxu0 0.0
    %621 = vmatpush1.xpose.msra.mxu0 0.0
    %622 = vmatprep.mubr.f32.mxu0 0.0
    %v623 = vand.u32 %v68, 4294901760
    %v624 = vsub.f32 %v68, %v623
    %v625 = vand.u32 %v624, 4294901760
    %626 = vmatmul.mubr.f32.gmra.mrb[0].mxu0 %v625
    %v627 = vpop.f32.mrb[0].mxu0
    %v628 = vadd.f32 %v518, %v627
    %v629 = vpop.f32.mrb[0].mxu0
    %630 = vmatprep.mubr.f32.mxu0 0.0
    %v631 = vand.u32 %v71, 4294901760
    %v632 = vsub.f32 %v71, %v631
    %v633 = vand.u32 %v632, 4294901760
    %634 = vmatmul.mubr.f32.gmra.mrb[0].mxu0 %v633
    %v635 = vpop.f32.mrb[0].mxu0
    %v636 = vadd.f32 %v525, %v635
    %v637 = vpop.f32.mrb[0].mxu0
    %638 = vmatprep.mubr.f32.mxu0 0.0
    %v639 = vand.u32 %v74, 4294901760
    %v640 = vsub.f32 %v74, %v639
    %v641 = vand.u32 %v640, 4294901760
    %642 = vmatmul.mubr.f32.gmra.mrb[0].mxu0 %v641
    %v643 = vpop.f32.mrb[0].mxu0
    %v644 = vadd.f32 %v532, %v643
    %v645 = vpop.f32.mrb[0].mxu0
    %646 = vmatprep.mubr.f32.mxu0 0.0
    %v647 = vand.u32 %v77, 4294901760
    %v648 = vsub.f32 %v77, %v647
    %v649 = vand.u32 %v648, 4294901760
    %650 = vmatmul.mubr.f32.gmra.mrb[0].mxu0 %v649
    %v651 = vpop.f32.mrb[0].mxu0
    %v652 = vadd.f32 %v539, %v651
    %v653 = vpop.f32.mrb[0].mxu0
    %654 = vdwg.mxu0
    %655 = vmatprep.subr.mxu0 0.0
    %v656 = vand.u32 %v80, 4294901760
    %v657 = vsub.f32 %v80, %v656
    %v658 = vand.u32 %v657, 4294901760
    %659 = vmatpush1.xpose.msra.mxu0 %v658
    %660 = vmatprep.subr.mxu0 0.0
    %v661 = vand.u32 %v83, 4294901760
    %v662 = vsub.f32 %v83, %v661
    %v663 = vand.u32 %v662, 4294901760
    %664 = vmatpush1.xpose.msra.mxu0 %v663
    %665 = vmatprep.subr.mxu0 0.0
    %v666 = vand.u32 %v86, 4294901760
    %v667 = vsub.f32 %v86, %v666
    %v668 = vand.u32 %v667, 4294901760
    %669 = vmatpush1.xpose.msra.mxu0 %v668
    %670 = vmatprep.subr.mxu0 0.0
    %v671 = vand.u32 %v89, 4294901760
    %v672 = vsub.f32 %v89, %v671
    %v673 = vand.u32 %v672, 4294901760
    %674 = vmatpush1.xpose.msra.mxu0 %v673
    %675 = vmatprep.subr.mxu0 0.0
    %v676 = vand.u32 %v92, 4294901760
    %v677 = vsub.f32 %v92, %v676
    %v678 = vand.u32 %v677, 4294901760
    %679 = vmatpush1.xpose.msra.mxu0 %v678
    %680 = vmatprep.subr.mxu0 0.0
    %v681 = vand.u32 %v95, 4294901760
    %v682 = vsub.f32 %v95, %v681
    %v683 = vand.u32 %v682, 4294901760
    %684 = vmatpush1.xpose.msra.mxu0 %v683
    %685 = vmatprep.subr.mxu0 0.0
    %v686 = vand.u32 %v98, 4294901760
    %v687 = vsub.f32 %v98, %v686
    %v688 = vand.u32 %v687, 4294901760
    %689 = vmatpush1.xpose.msra.mxu0 %v688
    %690 = vmatprep.subr.mxu0 0.0
    %v691 = vand.u32 %v101, 4294901760
    %v692 = vsub.f32 %v101, %v691
    %v693 = vand.u32 %v692, 4294901760
    %694 = vmatpush1.xpose.msra.mxu0 %v693
    %695 = vmatprep.subr.mxu0 0.0
    %v696 = vand.u32 %v104, 4294901760
    %v697 = vsub.f32 %v104, %v696
    %v698 = vand.u32 %v697, 4294901760
    %699 = vmatpush1.xpose.msra.mxu0 %v698
    %700 = vmatprep.subr.mxu0 0.0
    %v701 = vand.u32 %v107, 4294901760
    %v702 = vsub.f32 %v107, %v701
    %v703 = vand.u32 %v702, 4294901760
    %704 = vmatpush1.xpose.msra.mxu0 %v703
    %705 = vmatprep.subr.mxu0 0.0
    %v706 = vand.u32 %v110, 4294901760
    %v707 = vsub.f32 %v110, %v706
    %v708 = vand.u32 %v707, 4294901760
    %709 = vmatpush1.xpose.msra.mxu0 %v708
    %710 = vmatprep.subr.mxu0 0.0
    %v711 = vand.u32 %v113, 4294901760
    %v712 = vsub.f32 %v113, %v711
    %v713 = vand.u32 %v712, 4294901760
    %714 = vmatpush1.xpose.msra.mxu0 %v713
    %715 = vmatprep.subr.mxu0 0.0
    %v716 = vand.u32 %v116, 4294901760
    %v717 = vsub.f32 %v116, %v716
    %v718 = vand.u32 %v717, 4294901760
    %719 = vmatpush1.xpose.msra.mxu0 %v718
    %720 = vmatprep.subr.mxu0 0.0
    %v721 = vand.u32 %v119, 4294901760
    %v722 = vsub.f32 %v119, %v721
    %v723 = vand.u32 %v722, 4294901760
    %724 = vmatpush1.xpose.msra.mxu0 %v723
    %725 = vmatprep.subr.mxu0 0.0
    %v726 = vand.u32 %v122, 4294901760
    %v727 = vsub.f32 %v122, %v726
    %v728 = vand.u32 %v727, 4294901760
    %729 = vmatpush1.xpose.msra.mxu0 %v728
    %730 = vmatprep.subr.mxu0 0.0
    %v731 = vand.u32 %v125, 4294901760
    %v732 = vsub.f32 %v125, %v731
    %v733 = vand.u32 %v732, 4294901760
    %734 = vmatpush1.xpose.msra.mxu0 %v733
    %735 = vmatprep.subr.mxu0 0.0
    %736 = vmatpush1.xpose.msra.mxu0 0.0
    %737 = vmatprep.subr.mxu0 0.0
    %738 = vmatpush1.xpose.msra.mxu0 0.0
    %739 = vmatprep.subr.mxu0 0.0
    %740 = vmatpush1.xpose.msra.mxu0 0.0
    %741 = vmatprep.subr.mxu0 0.0
    %742 = vmatpush1.xpose.msra.mxu0 0.0
    %743 = vmatprep.subr.mxu0 0.0
    %744 = vmatpush1.xpose.msra.mxu0 0.0
    %745 = vmatprep.subr.mxu0 0.0
    %746 = vmatpush1.xpose.msra.mxu0 0.0
    %747 = vmatprep.subr.mxu0 0.0
    %748 = vmatpush1.xpose.msra.mxu0 0.0
    %749 = vmatprep.subr.mxu0 0.0
    %750 = vmatpush1.xpose.msra.mxu0 0.0
    %751 = vmatprep.subr.mxu0 0.0
    %752 = vmatpush1.xpose.msra.mxu0 0.0
    %753 = vmatprep.subr.mxu0 0.0
    %754 = vmatpush1.xpose.msra.mxu0 0.0
    %755 = vmatprep.subr.mxu0 0.0
    %756 = vmatpush1.xpose.msra.mxu0 0.0
    %757 = vmatprep.subr.mxu0 0.0
    %758 = vmatpush1.xpose.msra.mxu0 0.0
    %759 = vmatprep.subr.mxu0 0.0
    %760 = vmatpush1.xpose.msra.mxu0 0.0
    %761 = vmatprep.subr.mxu0 0.0
    %762 = vmatpush1.xpose.msra.mxu0 0.0
    %763 = vmatprep.subr.mxu0 0.0
    %764 = vmatpush1.xpose.msra.mxu0 0.0
    %765 = vmatprep.subr.mxu0 0.0
    %766 = vmatpush1.xpose.msra.mxu0 0.0
    %767 = vmatprep.mubr.f32.mxu0 0.0
    %v768 = vand.u32 %v68, 4294901760
    %769 = vmatmul.mubr.f32.gmra.mrb[0].mxu0 %v768
    %v770 = vpop.f32.mrb[0].mxu0
    %v771 = vadd.f32 %v628, %v770
    %v772 = vpop.f32.mrb[0].mxu0
    %773 = vmatprep.mubr.f32.mxu0 0.0
    %v774 = vand.u32 %v71, 4294901760
    %775 = vmatmul.mubr.f32.gmra.mrb[0].mxu0 %v774
    %v776 = vpop.f32.mrb[0].mxu0
    %v777 = vadd.f32 %v636, %v776
    %v778 = vpop.f32.mrb[0].mxu0
    %779 = vmatprep.mubr.f32.mxu0 0.0
    %v780 = vand.u32 %v74, 4294901760
    %781 = vmatmul.mubr.f32.gmra.mrb[0].mxu0 %v780
    %v782 = vpop.f32.mrb[0].mxu0
    %v783 = vadd.f32 %v644, %v782
    %v784 = vpop.f32.mrb[0].mxu0
    %785 = vmatprep.mubr.f32.mxu0 0.0
    %v786 = vand.u32 %v77, 4294901760
    %787 = vmatmul.mubr.f32.gmra.mrb[0].mxu0 %v786
    %v788 = vpop.f32.mrb[0].mxu0
    %v789 = vadd.f32 %v652, %v788
    %v790 = vpop.f32.mrb[0].mxu0
    %791 = vdwg.mxu0
    %792 = vmatprep.subr.mxu0 0.0
    %v793 = vand.u32 %v80, 4294901760
    %794 = vmatpush1.xpose.msra.mxu0 %v793
    %795 = vmatprep.subr.mxu0 0.0
    %v796 = vand.u32 %v83, 4294901760
    %797 = vmatpush1.xpose.msra.mxu0 %v796
    %798 = vmatprep.subr.mxu0 0.0
    %v799 = vand.u32 %v86, 4294901760
    %800 = vmatpush1.xpose.msra.mxu0 %v799
    %801 = vmatprep.subr.mxu0 0.0
    %v802 = vand.u32 %v89, 4294901760
    %803 = vmatpush1.xpose.msra.mxu0 %v802
    %804 = vmatprep.subr.mxu0 0.0
    %v805 = vand.u32 %v92, 4294901760
    %806 = vmatpush1.xpose.msra.mxu0 %v805
    %807 = vmatprep.subr.mxu0 0.0
    %v808 = vand.u32 %v95, 4294901760
    %809 = vmatpush1.xpose.msra.mxu0 %v808
    %810 = vmatprep.subr.mxu0 0.0
    %v811 = vand.u32 %v98, 4294901760
    %812 = vmatpush1.xpose.msra.mxu0 %v811
    %813 = vmatprep.subr.mxu0 0.0
    %v814 = vand.u32 %v101, 4294901760
    %815 = vmatpush1.xpose.msra.mxu0 %v814
    %816 = vmatprep.subr.mxu0 0.0
    %v817 = vand.u32 %v104, 4294901760
    %818 = vmatpush1.xpose.msra.mxu0 %v817
    %819 = vmatprep.subr.mxu0 0.0
    %v820 = vand.u32 %v107, 4294901760
    %821 = vmatpush1.xpose.msra.mxu0 %v820
    %822 = vmatprep.subr.mxu0 0.0
    %v823 = vand.u32 %v110, 4294901760
    %824 = vmatpush1.xpose.msra.mxu0 %v823
    %825 = vmatprep.subr.mxu0 0.0
    %v826 = vand.u32 %v113, 4294901760
    %827 = vmatpush1.xpose.msra.mxu0 %v826
    %828 = vmatprep.subr.mxu0 0.0
    %v829 = vand.u32 %v116, 4294901760
    %830 = vmatpush1.xpose.msra.mxu0 %v829
    %831 = vmatprep.subr.mxu0 0.0
    %v832 = vand.u32 %v119, 4294901760
    %833 = vmatpush1.xpose.msra.mxu0 %v832
    %834 = vmatprep.subr.mxu0 0.0
    %v835 = vand.u32 %v122, 4294901760
    %836 = vmatpush1.xpose.msra.mxu0 %v835
    %837 = vmatprep.subr.mxu0 0.0
    %v838 = vand.u32 %v125, 4294901760
    %839 = vmatpush1.xpose.msra.mxu0 %v838
    %840 = vmatprep.subr.mxu0 0.0
    %841 = vmatpush1.xpose.msra.mxu0 0.0
    %842 = vmatprep.subr.mxu0 0.0
    %843 = vmatpush1.xpose.msra.mxu0 0.0
    %844 = vmatprep.subr.mxu0 0.0
    %845 = vmatpush1.xpose.msra.mxu0 0.0
    %846 = vmatprep.subr.mxu0 0.0
    %847 = vmatpush1.xpose.msra.mxu0 0.0
    %848 = vmatprep.subr.mxu0 0.0
    %849 = vmatpush1.xpose.msra.mxu0 0.0
    %850 = vmatprep.subr.mxu0 0.0
    %851 = vmatpush1.xpose.msra.mxu0 0.0
    %852 = vmatprep.subr.mxu0 0.0
    %853 = vmatpush1.xpose.msra.mxu0 0.0
    %854 = vmatprep.subr.mxu0 0.0
    %855 = vmatpush1.xpose.msra.mxu0 0.0
    %856 = vmatprep.subr.mxu0 0.0
    %857 = vmatpush1.xpose.msra.mxu0 0.0
    %858 = vmatprep.subr.mxu0 0.0
    %859 = vmatpush1.xpose.msra.mxu0 0.0
    %860 = vmatprep.subr.mxu0 0.0
    %861 = vmatpush1.xpose.msra.mxu0 0.0
    %862 = vmatprep.subr.mxu0 0.0
    %863 = vmatpush1.xpose.msra.mxu0 0.0
    %864 = vmatprep.subr.mxu0 0.0
    %865 = vmatpush1.xpose.msra.mxu0 0.0
    %866 = vmatprep.subr.mxu0 0.0
    %867 = vmatpush1.xpose.msra.mxu0 0.0
    %868 = vmatprep.subr.mxu0 0.0
    %869 = vmatpush1.xpose.msra.mxu0 0.0
    %870 = vmatprep.subr.mxu0 0.0
    %871 = vmatpush1.xpose.msra.mxu0 0.0
    %872 = vmatprep.mubr.f32.mxu0 0.0
    %v873 = vand.u32 %v68, 4294901760
    %874 = vmatmul.mubr.f32.gmra.mrb[0].mxu0 %v873
    %v875 = vpop.f32.mrb[0].mxu0
    %v876 = vadd.f32 %v771, %v875
    %v877 = vpop.f32.mrb[0].mxu0
    %878 = vmatprep.mubr.f32.mxu0 0.0
    %v879 = vand.u32 %v71, 4294901760
    %880 = vmatmul.mubr.f32.gmra.mrb[0].mxu0 %v879
    %v881 = vpop.f32.mrb[0].mxu0
    %v882 = vadd.f32 %v777, %v881
    %v883 = vpop.f32.mrb[0].mxu0
    %884 = vmatprep.mubr.f32.mxu0 0.0
    %v885 = vand.u32 %v74, 4294901760
    %886 = vmatmul.mubr.f32.gmra.mrb[0].mxu0 %v885
    %v887 = vpop.f32.mrb[0].mxu0
    %v888 = vadd.f32 %v783, %v887
    %v889 = vpop.f32.mrb[0].mxu0
    %890 = vmatprep.mubr.f32.mxu0 0.0
    %v891 = vand.u32 %v77, 4294901760
    %892 = vmatmul.mubr.f32.gmra.mrb[0].mxu0 %v891
    %v893 = vpop.f32.mrb[0].mxu0
    %v894 = vadd.f32 %v789, %v893
    %v895 = vpop.f32.mrb[0].mxu0
    %896 = vdwg.mxu0
    %v897 = vmul.f32 %v876, 0.5
    %v898 = vmul.f32 %v882, 0.5
    %v899 = vmul.f32 %v888, 0.5
    %v900 = vmul.f32 %v894, 0.5
    %v901 = vtanh.pop %v897
    %v902 = vtanh.pop %v898
    %v903 = vtanh.pop %v899
    %v904 = vtanh.pop %v900
    %v905 = vadd.f32 %v901, 1.0
    %v906 = vadd.f32 %v902, 1.0
    %v907 = vadd.f32 %v903, 1.0
    %v908 = vadd.f32 %v904, 1.0
    %v909 = vmul.f32 %v905, 0.5
    %v910 = vmul.f32 %v906, 0.5
    %v911 = vmul.f32 %v907, 0.5
    %v912 = vmul.f32 %v908, 0.5
    %v913 = vld [vmem:[%s3] sm:$0xff]
    %v914 = vld [vmem:[%s3 + $0x8] sm:$0xff]
    %v915 = vld [vmem:[%s3 + $0x10] sm:$0xff]
    %v916 = vld [vmem:[%s3 + $0x18] sm:$0xff]
    %918 = vset.pattern.permute.xlu0 0
    %919 = vperm.xlu0 %918, %v913
    %v920 = vpop.permute.xlu0 %919
    %923 = vset.pattern.permute.xlu0 0
    %924 = vperm.xlu0 %923, %v914
    %v925 = vpop.permute.xlu0 %924
    %928 = vset.pattern.permute.xlu0 0
    %929 = vperm.xlu0 %928, %v915
    %v930 = vpop.permute.xlu0 %929
    %933 = vset.pattern.permute.xlu0 0
    %934 = vperm.xlu0 %933, %v916
    %v935 = vpop.permute.xlu0 %934
    %v937 = vmul.f32 %v909, %v920
    %v938 = vmul.f32 %v910, %v925
    %v939 = vmul.f32 %v911, %v930
    %v940 = vmul.f32 %v912, %v935
    %v941 = vadd.f32 %v937, %v938
    %v942 = vadd.f32 %v941, %v939
    %v943 = vadd.f32 %v942, %v940
    %v944 = vrot.slane %v943, 4
    %v945 = vadd.f32 %v943, %v944
    %v946 = vrot.slane %v945, 2
    %v947 = vadd.f32 %v945, %v946
    %v948 = vrot.slane %v947, 1
    %v949 = vadd.f32 %v947, %v948
    %s950 = sld [smem:[#allocation2]]
    %v951 = vstv %s950
    %v952 = vadd.f32 %v949, %v951
    %953 = vst [vmem:[#allocation3] sm:$0x1] %v952
    // Predicated region
    $region22: #{tpu_custom_call.1} parent=1 // pred_check
      _
    $region23: #{tpu_custom_call.1} parent=1 // pred_check_branch
      %955 = sbr.rel (0) target = $region25
    $region24: #{tpu_custom_call.1} parent=1 // pred_region
      %s957 = ssub.s32 16, 16
      %958 = vsyncadd [#allocation4], %s957
      %s960 = sshll.u32 [#allocation3], 4
      %s961 = int_to_ptr.vmem [resolvable:$true] %s960
      %963 = dma.vmem_to_hbm [thread:$0]  %s961, 16, %s5, [#allocation4]
    $region25: #{tpu_custom_call.1} parent=1 // pred_fallthru
      _
    // Predicated region
    $region26: #{tpu_custom_call.1} parent=1 // pred_check
      _
    $region27: #{tpu_custom_call.1} parent=1 // pred_check_branch
      %965 = sbr.rel (0) target = $region29
    $region28: #{tpu_custom_call.1} parent=1 // pred_region
      %966 = dma.done [#allocation4], 16
    $region29: #{tpu_custom_call.1} parent=1 // pred_fallthru
      _
    %967 = vsyncpa [#allocation4], 1

</llo_original>
